<compile_context>
chip_gen: v7x
topology: tpu7x:2x2x1
jax: 0.10.0
libtpu: 0.0.40
codegen_flags: <defaults>
</compile_context>

<pallas_src>
import jax
import jax.numpy as jnp
from jax.experimental import pallas as pl
from jax.experimental.pallas import tpu as pltpu

SELU_ALPHA = 1.6732632423543772
SELU_SCALE = 1.0507009873554804


def _round_up(x, m):
    return (x + m - 1) // m * m


def _selu(x):
    # exp argument clamped so the discarded positive branch never produces inf.
    return SELU_SCALE * jnp.where(
        x > 0.0, x, SELU_ALPHA * (jnp.exp(jnp.minimum(x, 0.0)) - 1.0))


def _make_kernel(n_subtiles, sub_rows):
    """Kernel factory: n_subtiles independent row-halves per grid step so the
    LLO scheduler can overlap the MXU matmul of one half with the EUP/VPU SELU
    epilogue of the other half."""

    def kernel(ximg_ref, xgrad_ref,
               w1a_ref, w1b_ref, b1_ref,
               w2_ref, b2_ref,
               w3_ref, b3_ref,
               out_ref):
        bf16 = jnp.bfloat16
        for s in range(n_subtiles):
            rows = pl.ds(s * sub_rows, sub_rows)

            # layer1: Linear(2*D -> inner) on concat(x_image, x_grad) + SELU,
            # expressed as split matmul: [ximg|xgrad] @ [[w1a],[w1b]].
            # Inputs arrive bf16 (MXU-native); accumulate in f32.
            h1 = (jnp.dot(ximg_ref[rows, :], w1a_ref[...],
                          preferred_element_type=jnp.float32)
                  + jnp.dot(xgrad_ref[rows, :], w1b_ref[...],
                            preferred_element_type=jnp.float32)
                  + b1_ref[...])
            h1 = _selu(h1)

            # layer2: Linear(inner -> D) + SELU
            h2 = (jnp.dot(h1.astype(bf16), w2_ref[...],
                          preferred_element_type=jnp.float32) + b2_ref[...])
            h2 = _selu(h2)

            # layer3: Linear(D -> D) + SELU on (layer2 + 0.4 * x_grad).
            # Re-read xgrad at point of use instead of holding it live.
            h3_in = (h2 + 0.4 * xgrad_ref[rows, :].astype(jnp.float32)).astype(bf16)
            h3 = (jnp.dot(h3_in, w3_ref[...],
                          preferred_element_type=jnp.float32) + b3_ref[...])
            h3 = _selu(h3)

            # norm layer: sigmoid((x + x_image - 0.5) * 5) in tanh form so the
            # transcendental lands on the EUP slot.
            z = (h3 + ximg_ref[rows, :].astype(jnp.float32) - 0.5) * 5.0
            out_ref[rows, :] = 0.5 * jnp.tanh(0.5 * z) + 0.5

    return kernel


def _tpu_budget():
    """(vmem_capacity_bytes, is_v7x_like) with safe fallbacks."""
    vmem_cap = None
    try:
        vmem_cap = int(pltpu.get_tpu_info().vmem_capacity_bytes)
    except Exception:
        vmem_cap = None
    kind = ""
    try:
        kind = jax.devices()[0].device_kind.lower()
    except Exception:
        pass
    if vmem_cap is None:
        vmem_cap = 64 * 2 ** 20 if "v7" in kind else 128 * 2 ** 20
    is_v7 = ("v7" in kind) or (vmem_cap <= 80 * 2 ** 20)
    return vmem_cap, is_v7


def _choose_tm(batch, tm_cap, min_grid):
    """Pick TM (multiple of 8, <= tm_cap) minimizing padded-batch waste, then
    minimizing grid steps; prefer grid >= min_grid when achievable."""
    b8 = _round_up(max(batch, 1), 8)
    cap = max(8, min(tm_cap, b8))
    best_key, best = None, None
    for tm in range(8, cap + 1, 8):
        b_pad = _round_up(b8, tm)
        grid = b_pad // tm
        key = (0 if grid >= min_grid else 1, b_pad, grid)
        if best_key is None or key < best_key:
            best_key, best = key, (tm, b_pad)
    return best


def gatn_fc_forward(x_image, x_grad, params, *, channel, width):
    """x_image, x_grad: (B, C, W, W) float32.  Returns (B, C, W, W) float32."""
    B = x_image.shape[0]
    D = channel * width * width
    w1a, w1b, b1, w2, b2, w3, b3 = params
    inner = w1a.shape[1]

    # --- lane/sublane-dense padding -------------------------------------
    D_pad = _round_up(D, 128)
    inner_pad = _round_up(inner, 128)

    vmem_cap, is_v7 = _tpu_budget()
    tm_cap = 256 if is_v7 else 512          # v7x: 64 MiB VMEM; v5e/v6e: 128 MiB
    min_grid = 2 if is_v7 else 1            # give both v7x TCs work when possible
    TM, B_pad = _choose_tm(B, tm_cap, min_grid)
    grid_len = B_pad // TM
    n_sub = 2 if (TM % 16 == 0 and TM >= 64) else 1

    def pad2(a, rows, cols):
        return jnp.pad(a, ((0, rows - a.shape[0]), (0, cols - a.shape[1])))

    bf16 = jnp.bfloat16
    # Activations travel HBM<->VMEM as bf16 (halves per-step DMA in the
    # mem-bound regime); padded rows/cols are zero and SELU(0)=0 so padding is
    # value-preserving; padded region is sliced off at the end.
    ximg2d = pad2(x_image.reshape(B, D).astype(bf16), B_pad, D_pad)
    xgrad2d = pad2(x_grad.reshape(B, D).astype(bf16), B_pad, D_pad)

    w1a_p = pad2(w1a.astype(bf16), D_pad, inner_pad)
    w1b_p = pad2(w1b.astype(bf16), D_pad, inner_pad)
    b1_p = pad2(b1.astype(jnp.float32), 1, inner_pad)
    w2_p = pad2(w2.astype(bf16), inner_pad, D_pad)
    b2_p = pad2(b2.astype(jnp.float32), 1, D_pad)
    w3_p = pad2(w3.astype(bf16), D_pad, D_pad)
    b3_p = pad2(b3.astype(jnp.float32), 1, D_pad)

    # --- VMEM budget (generation-aware, no silent clamping) -------------
    n_act_bufs = 3 if (is_v7 and grid_len >= 3) else 2
    act_bytes = n_act_bufs * (2 * TM * D_pad * 2) + 2 * (TM * D_pad * 4)
    weight_bytes = ((w1a_p.size + w1b_p.size + w2_p.size + w3_p.size) * 2
                    + (b1_p.size + b2_p.size + b3_p.size) * 4)   # single-buffered
    tmp_bytes = 8 * TM * max(inner_pad, D_pad) * 4               # intermediates
    vmem_need = act_bytes + weight_bytes + tmp_bytes

    vmem_budget = (vmem_cap * 3) // 4
    if vmem_need > vmem_budget:
        # TODO(synk): switch to streamed (emit_pipeline) / fp8 w3 for this case.
        raise ValueError(
            f"GATN_FC resident set ({vmem_need} B) exceeds VMEM budget "
            f"({vmem_budget} B on this chip); w3 streaming not implemented.")
    vmem_limit = int(min(vmem_budget, max(2 * vmem_need, 8 * 2 ** 20)))

    # --- cost estimate so XLA schedules around the custom call sensibly --
    flops = 2 * B_pad * (2 * D_pad * inner_pad + inner_pad * D_pad + D_pad * D_pad)
    transcendentals = B_pad * (inner_pad + 3 * D_pad)
    bytes_accessed = int(2 * B_pad * D_pad * 2 + B_pad * D_pad * 4 + weight_bytes)
    cost = pl.CostEstimate(flops=int(flops),
                           transcendentals=int(transcendentals),
                           bytes_accessed=bytes_accessed)

    # --- specs ------------------------------------------------------------
    if n_act_bufs != 2:
        # v7x: deeper input buffering keeps the small per-step DMA a step ahead.
        act_in_spec = pl.BlockSpec((TM, D_pad), lambda i: (i, 0),
                                   pipeline_mode=pl.Buffered(n_act_bufs))
    else:
        act_in_spec = pl.BlockSpec((TM, D_pad), lambda i: (i, 0))
    out_spec = pl.BlockSpec((TM, D_pad), lambda i: (i, 0))
    # Whole-array VMEM residency, single buffer (outside the revolving pipeline).
    resident = pl.BlockSpec(memory_space=pltpu.MemorySpace.VMEM)

    out2d = pl.pallas_call(
        _make_kernel(n_sub, TM // n_sub),
        out_shape=jax.ShapeDtypeStruct((B_pad, D_pad), jnp.float32),
        grid=(grid_len,),
        in_specs=[act_in_spec, act_in_spec,
                  resident, resident, resident,
                  resident, resident,
                  resident, resident],
        out_specs=out_spec,
        compiler_params=pltpu.CompilerParams(
            dimension_semantics=("parallel",),
            vmem_limit_bytes=vmem_limit),
        cost_estimate=cost,
    )(ximg2d, xgrad2d, w1a_p, w1b_p, b1_p, w2_p, b2_p, w3_p, b3_p)

    return out2d[:B, :D].reshape(B, channel, width, width)


def init_params(key, *, channel, width, innerlayer):
    """Deterministic xavier-normal weights (as in the module) + small biases."""
    D = channel * width * width
    k1, k2, k3, kb1, kb2, kb3 = jax.random.split(key, 6)

    def xavier(k, fan_in, fan_out):
        std = (2.0 / (fan_in + fan_out)) ** 0.5
        # stored as (in, out) so the kernel computes x @ W
        return std * jax.random.normal(k, (fan_in, fan_out), dtype=jnp.float32)

    def bias(k, fan_in, fan_out):
        bound = 1.0 / (fan_in ** 0.5)
        return jax.random.uniform(k, (1, fan_out), dtype=jnp.float32,
                                  minval=-bound, maxval=bound)

    # layer1: Linear(2*D -> inner).  Split its (2D, inner) weight into the
    # image half (first D input features) and the grad half (last D).
    w1_full = xavier(k1, 2 * D, innerlayer)
    w1a = w1_full[:D, :]
    w1b = w1_full[D:, :]
    b1 = bias(kb1, 2 * D, innerlayer)

    w2 = xavier(k2, innerlayer, D)
    b2 = bias(kb2, innerlayer, D)

    w3 = xavier(k3, D, D)
    b3 = bias(kb3, D, D)

    return (w1a, w1b, b1, w2, b2, w3, b3)


def reference_forward(x_image, x_grad, params, *, channel, width):
    """Pure-JAX reference mirroring the PyTorch forward with the kernel's
    numerics (bf16 activations/weights on the MXU, f32 accumulation)."""
    B = x_image.shape[0]
    D = channel * width * width
    bf16 = jnp.bfloat16
    ximg_b = x_image.reshape(B, D).astype(bf16)
    xgrad_b = x_grad.reshape(B, D).astype(bf16)
    ximg = ximg_b.astype(jnp.float32)
    xgrad = xgrad_b.astype(jnp.float32)
    w1a, w1b, b1, w2, b2, w3, b3 = params

    def mm(a, w):
        return jnp.dot(a.astype(bf16), w.astype(bf16),
                       preferred_element_type=jnp.float32)

    h1 = jax.nn.selu(mm(ximg_b, w1a) + mm(xgrad_b, w1b) + b1)
    h2 = jax.nn.selu(mm(h1, w2) + b2)
    h3 = jax.nn.selu(mm(h2 + 0.4 * xgrad, w3) + b3)
    out = jax.nn.sigmoid((h3 + ximg - 0.5) * 5.0)
    return out.reshape(B, channel, width, width)


if __name__ == "__main__":
    batch, channel, width, innerlayer = 2, 1, 16, 32  # small synthetic shapes

    key = jax.random.PRNGKey(0)
    kx, kg, kp = jax.random.split(key, 3)
    x_image = jax.random.uniform(kx, (batch, channel, width, width),
                                 dtype=jnp.float32)
    x_grad = 0.1 * jax.random.normal(kg, (batch, channel, width, width),
                                     dtype=jnp.float32)

    params = init_params(kp, channel=channel, width=width, innerlayer=innerlayer)

    out = gatn_fc_forward(x_image, x_grad, params, channel=channel, width=width)
    out = jax.block_until_ready(out)

    ref = reference_forward(x_image, x_grad, params, channel=channel, width=width)
    assert out.shape == (batch, channel, width, width)
    err = float(jnp.max(jnp.abs(out - ref)))
    assert jnp.allclose(out, ref, atol=5e-4, rtol=5e-4), err

    print("KERNEL_OK")
</pallas_src>

<mosaic_0001>
module attributes {stable_mosaic.version = 11 : i64} {
  func.func @kernel(%arg0: i32, %arg1: memref<8x256xbf16, #tpu.memory_space<vmem>>, %arg2: memref<8x256xbf16, #tpu.memory_space<vmem>>, %arg3: memref<256x128xbf16, #tpu.memory_space<vmem>>, %arg4: memref<256x128xbf16, #tpu.memory_space<vmem>>, %arg5: memref<1x128xf32, #tpu.memory_space<vmem>>, %arg6: memref<128x256xbf16, #tpu.memory_space<vmem>>, %arg7: memref<1x256xf32, #tpu.memory_space<vmem>>, %arg8: memref<256x256xbf16, #tpu.memory_space<vmem>>, %arg9: memref<1x256xf32, #tpu.memory_space<vmem>>, %arg10: memref<8x256xf32, #tpu.memory_space<vmem>>) attributes {dimension_semantics = [#tpu.dimension_semantics<parallel>], iteration_bounds = array<i64: 1>, scalar_prefetch = 0 : i64, scratch_operands = 0 : i64, tpu.core_type = #tpu.core_type<tc>, window_params = [{transform_indices = @transform_0, window_bounds = array<i64: 8, 256>}, {transform_indices = @transform_1, window_bounds = array<i64: 8, 256>}, {pipeline_mode = #tpu.pipeline_mode<synchronous>, transform_indices = @transform_2, window_bounds = array<i64: 256, 128>}, {pipeline_mode = #tpu.pipeline_mode<synchronous>, transform_indices = @transform_3, window_bounds = array<i64: 256, 128>}, {pipeline_mode = #tpu.pipeline_mode<synchronous>, transform_indices = @transform_4, window_bounds = array<i64: 1, 128>}, {pipeline_mode = #tpu.pipeline_mode<synchronous>, transform_indices = @transform_5, window_bounds = array<i64: 128, 256>}, {pipeline_mode = #tpu.pipeline_mode<synchronous>, transform_indices = @transform_6, window_bounds = array<i64: 1, 256>}, {pipeline_mode = #tpu.pipeline_mode<synchronous>, transform_indices = @transform_7, window_bounds = array<i64: 256, 256>}, {pipeline_mode = #tpu.pipeline_mode<synchronous>, transform_indices = @transform_8, window_bounds = array<i64: 1, 256>}, {transform_indices = @transform_9, window_bounds = array<i64: 8, 256>}]} {
    %c0 = arith.constant 0 : index
    %c0_0 = arith.constant 0 : index
    %0 = vector.load %arg1[%c0, %c0_0] : memref<8x256xbf16, #tpu.memory_space<vmem>>, vector<8x256xbf16>
    %c0_1 = arith.constant 0 : index
    %c0_2 = arith.constant 0 : index
    %1 = vector.load %arg3[%c0_1, %c0_2] : memref<256x128xbf16, #tpu.memory_space<vmem>>, vector<256x128xbf16>
    %cst = arith.constant dense<0.000000e+00> : vector<8x128xf32>
    %2 = tpu.matmul %0, %1, %cst {dimension_numbers = #tpu.dot_dimension_numbers<[1], [0], [0], [1], [0, 0, 1, 1], [], []>} : vector<8x256xbf16>, vector<256x128xbf16>, vector<8x128xf32> -> vector<8x128xf32>
    %c0_3 = arith.constant 0 : index
    %c0_4 = arith.constant 0 : index
    %3 = vector.load %arg2[%c0_3, %c0_4] : memref<8x256xbf16, #tpu.memory_space<vmem>>, vector<8x256xbf16>
    %c0_5 = arith.constant 0 : index
    %c0_6 = arith.constant 0 : index
    %4 = vector.load %arg4[%c0_5, %c0_6] : memref<256x128xbf16, #tpu.memory_space<vmem>>, vector<256x128xbf16>
    %cst_7 = arith.constant dense<0.000000e+00> : vector<8x128xf32>
    %5 = tpu.matmul %3, %4, %cst_7 {dimension_numbers = #tpu.dot_dimension_numbers<[1], [0], [0], [1], [0, 0, 1, 1], [], []>} : vector<8x256xbf16>, vector<256x128xbf16>, vector<8x128xf32> -> vector<8x128xf32>
    %6 = arith.addf %2, %5 : vector<8x128xf32>
    %c0_8 = arith.constant 0 : index
    %c0_9 = arith.constant 0 : index
    %7 = vector.load %arg5[%c0_8, %c0_9] : memref<1x128xf32, #tpu.memory_space<vmem>>, vector<1x128xf32>
    %8 = vector.broadcast %7 : vector<1x128xf32> to vector<8x128xf32>
    %9 = arith.addf %6, %8 : vector<8x128xf32>
    %cst_10 = arith.constant 0.000000e+00 : f32
    %10 = vector.broadcast %cst_10 : f32 to vector<8x128xf32>
    %11 = arith.cmpf ogt, %9, %10 : vector<8x128xf32>
    %cst_11 = arith.constant 0.000000e+00 : f32
    %12 = vector.broadcast %cst_11 : f32 to vector<8x128xf32>
    %13 = arith.minimumf %9, %12 : vector<8x128xf32>
    %14 = math.exp %13 : vector<8x128xf32>
    %cst_12 = arith.constant 1.000000e+00 : f32
    %15 = vector.broadcast %cst_12 : f32 to vector<8x128xf32>
    %16 = arith.subf %14, %15 : vector<8x128xf32>
    %cst_13 = arith.constant 1.67326319 : f32
    %17 = vector.broadcast %cst_13 : f32 to vector<8x128xf32>
    %18 = arith.mulf %17, %16 : vector<8x128xf32>
    %19 = arith.select %11, %9, %18 : vector<8x128xi1>, vector<8x128xf32>
    %cst_14 = arith.constant 1.05070102 : f32
    %20 = vector.broadcast %cst_14 : f32 to vector<8x128xf32>
    %21 = arith.mulf %20, %19 : vector<8x128xf32>
    %22 = arith.truncf %21 : vector<8x128xf32> to vector<8x128xbf16>
    %c0_15 = arith.constant 0 : index
    %c0_16 = arith.constant 0 : index
    %23 = vector.load %arg6[%c0_15, %c0_16] : memref<128x256xbf16, #tpu.memory_space<vmem>>, vector<128x256xbf16>
    %cst_17 = arith.constant dense<0.000000e+00> : vector<8x256xf32>
    %24 = tpu.matmul %22, %23, %cst_17 {dimension_numbers = #tpu.dot_dimension_numbers<[1], [0], [0], [1], [0, 0, 1, 1], [], []>} : vector<8x128xbf16>, vector<128x256xbf16>, vector<8x256xf32> -> vector<8x256xf32>
    %c0_18 = arith.constant 0 : index
    %c0_19 = arith.constant 0 : index
    %25 = vector.load %arg7[%c0_18, %c0_19] : memref<1x256xf32, #tpu.memory_space<vmem>>, vector<1x256xf32>
    %26 = vector.broadcast %25 : vector<1x256xf32> to vector<8x256xf32>
    %27 = arith.addf %24, %26 : vector<8x256xf32>
    %cst_20 = arith.constant 0.000000e+00 : f32
    %28 = vector.broadcast %cst_20 : f32 to vector<8x256xf32>
    %29 = arith.cmpf ogt, %27, %28 : vector<8x256xf32>
    %cst_21 = arith.constant 0.000000e+00 : f32
    %30 = vector.broadcast %cst_21 : f32 to vector<8x256xf32>
    %31 = arith.minimumf %27, %30 : vector<8x256xf32>
    %32 = math.exp %31 : vector<8x256xf32>
    %cst_22 = arith.constant 1.000000e+00 : f32
    %33 = vector.broadcast %cst_22 : f32 to vector<8x256xf32>
    %34 = arith.subf %32, %33 : vector<8x256xf32>
    %cst_23 = arith.constant 1.67326319 : f32
    %35 = vector.broadcast %cst_23 : f32 to vector<8x256xf32>
    %36 = arith.mulf %35, %34 : vector<8x256xf32>
    %37 = arith.select %29, %27, %36 : vector<8x256xi1>, vector<8x256xf32>
    %cst_24 = arith.constant 1.05070102 : f32
    %38 = vector.broadcast %cst_24 : f32 to vector<8x256xf32>
    %39 = arith.mulf %38, %37 : vector<8x256xf32>
    %c0_25 = arith.constant 0 : index
    %c0_26 = arith.constant 0 : index
    %40 = vector.load %arg2[%c0_25, %c0_26] : memref<8x256xbf16, #tpu.memory_space<vmem>>, vector<8x256xbf16>
    %41 = arith.extf %40 : vector<8x256xbf16> to vector<8x256xf32>
    %cst_27 = arith.constant 4.000000e-01 : f32
    %42 = vector.broadcast %cst_27 : f32 to vector<8x256xf32>
    %43 = arith.mulf %42, %41 : vector<8x256xf32>
    %44 = arith.addf %39, %43 : vector<8x256xf32>
    %45 = arith.truncf %44 : vector<8x256xf32> to vector<8x256xbf16>
    %c0_28 = arith.constant 0 : index
    %c0_29 = arith.constant 0 : index
    %46 = vector.load %arg8[%c0_28, %c0_29] : memref<256x256xbf16, #tpu.memory_space<vmem>>, vector<256x256xbf16>
    %cst_30 = arith.constant dense<0.000000e+00> : vector<8x256xf32>
    %47 = tpu.matmul %45, %46, %cst_30 {dimension_numbers = #tpu.dot_dimension_numbers<[1], [0], [0], [1], [0, 0, 1, 1], [], []>} : vector<8x256xbf16>, vector<256x256xbf16>, vector<8x256xf32> -> vector<8x256xf32>
    %c0_31 = arith.constant 0 : index
    %c0_32 = arith.constant 0 : index
    %48 = vector.load %arg9[%c0_31, %c0_32] : memref<1x256xf32, #tpu.memory_space<vmem>>, vector<1x256xf32>
    %49 = vector.broadcast %48 : vector<1x256xf32> to vector<8x256xf32>
    %50 = arith.addf %47, %49 : vector<8x256xf32>
    %cst_33 = arith.constant 0.000000e+00 : f32
    %51 = vector.broadcast %cst_33 : f32 to vector<8x256xf32>
    %52 = arith.cmpf ogt, %50, %51 : vector<8x256xf32>
    %cst_34 = arith.constant 0.000000e+00 : f32
    %53 = vector.broadcast %cst_34 : f32 to vector<8x256xf32>
    %54 = arith.minimumf %50, %53 : vector<8x256xf32>
    %55 = math.exp %54 : vector<8x256xf32>
    %cst_35 = arith.constant 1.000000e+00 : f32
    %56 = vector.broadcast %cst_35 : f32 to vector<8x256xf32>
    %57 = arith.subf %55, %56 : vector<8x256xf32>
    %cst_36 = arith.constant 1.67326319 : f32
    %58 = vector.broadcast %cst_36 : f32 to vector<8x256xf32>
    %59 = arith.mulf %58, %57 : vector<8x256xf32>
    %60 = arith.select %52, %50, %59 : vector<8x256xi1>, vector<8x256xf32>
    %cst_37 = arith.constant 1.05070102 : f32
    %61 = vector.broadcast %cst_37 : f32 to vector<8x256xf32>
    %62 = arith.mulf %61, %60 : vector<8x256xf32>
    %c0_38 = arith.constant 0 : index
    %c0_39 = arith.constant 0 : index
    %63 = vector.load %arg1[%c0_38, %c0_39] : memref<8x256xbf16, #tpu.memory_space<vmem>>, vector<8x256xbf16>
    %64 = arith.extf %63 : vector<8x256xbf16> to vector<8x256xf32>
    %65 = arith.addf %62, %64 : vector<8x256xf32>
    %cst_40 = arith.constant 5.000000e-01 : f32
    %66 = vector.broadcast %cst_40 : f32 to vector<8x256xf32>
    %67 = arith.subf %65, %66 : vector<8x256xf32>
    %cst_41 = arith.constant 5.000000e+00 : f32
    %68 = vector.broadcast %cst_41 : f32 to vector<8x256xf32>
    %69 = arith.mulf %67, %68 : vector<8x256xf32>
    %cst_42 = arith.constant 5.000000e-01 : f32
    %70 = vector.broadcast %cst_42 : f32 to vector<8x256xf32>
    %71 = arith.mulf %70, %69 : vector<8x256xf32>
    %72 = math.tanh %71 : vector<8x256xf32>
    %cst_43 = arith.constant 5.000000e-01 : f32
    %73 = vector.broadcast %cst_43 : f32 to vector<8x256xf32>
    %74 = arith.mulf %73, %72 : vector<8x256xf32>
    %cst_44 = arith.constant 5.000000e-01 : f32
    %75 = vector.broadcast %cst_44 : f32 to vector<8x256xf32>
    %76 = arith.addf %74, %75 : vector<8x256xf32>
    %c0_45 = arith.constant 0 : index
    %c0_46 = arith.constant 0 : index
    %77 = vector.load %arg10[%c0_45, %c0_46] : memref<8x256xf32, #tpu.memory_space<vmem>>, vector<8x256xf32>
    tpu.vector_store %arg10[%c0_45, %c0_46], %76 {strides = array<i32>} : memref<8x256xf32, #tpu.memory_space<vmem>>, vector<8x256xf32>,
    return
  }
  func.func @transform_0(%arg0: i32) -> (i32, i32) {
    %c0_i32 = arith.constant 0 : i32
    %c0_i32_0 = arith.constant 0 : i32
    return %arg0, %c0_i32 : i32, i32
  }
  func.func @transform_1(%arg0: i32) -> (i32, i32) {
    %c0_i32 = arith.constant 0 : i32
    %c0_i32_0 = arith.constant 0 : i32
    return %arg0, %c0_i32 : i32, i32
  }
  func.func @transform_2(%arg0: i32) -> (i32, i32) {
    %c0_i32 = arith.constant 0 : i32
    %c0_i32_0 = arith.constant 0 : i32
    %c0_i32_1 = arith.constant 0 : i32
    return %c0_i32, %c0_i32_0 : i32, i32
  }
  func.func @transform_3(%arg0: i32) -> (i32, i32) {
    %c0_i32 = arith.constant 0 : i32
    %c0_i32_0 = arith.constant 0 : i32
    %c0_i32_1 = arith.constant 0 : i32
    return %c0_i32, %c0_i32_0 : i32, i32
  }
  func.func @transform_4(%arg0: i32) -> (i32, i32) {
    %c0_i32 = arith.constant 0 : i32
    %c0_i32_0 = arith.constant 0 : i32
    %c0_i32_1 = arith.constant 0 : i32
    return %c0_i32, %c0_i32_0 : i32, i32
  }
  func.func @transform_5(%arg0: i32) -> (i32, i32) {
    %c0_i32 = arith.constant 0 : i32
    %c0_i32_0 = arith.constant 0 : i32
    %c0_i32_1 = arith.constant 0 : i32
    return %c0_i32, %c0_i32_0 : i32, i32
  }
  func.func @transform_6(%arg0: i32) -> (i32, i32) {
    %c0_i32 = arith.constant 0 : i32
    %c0_i32_0 = arith.constant 0 : i32
    %c0_i32_1 = arith.constant 0 : i32
    return %c0_i32, %c0_i32_0 : i32, i32
  }
  func.func @transform_7(%arg0: i32) -> (i32, i32) {
    %c0_i32 = arith.constant 0 : i32
    %c0_i32_0 = arith.constant 0 : i32
    %c0_i32_1 = arith.constant 0 : i32
    return %c0_i32, %c0_i32_0 : i32, i32
  }
  func.func @transform_8(%arg0: i32) -> (i32, i32) {
    %c0_i32 = arith.constant 0 : i32
    %c0_i32_0 = arith.constant 0 : i32
    %c0_i32_1 = arith.constant 0 : i32
    return %c0_i32, %c0_i32_0 : i32, i32
  }
  func.func @transform_9(%arg0: i32) -> (i32, i32) {
    %c0_i32 = arith.constant 0 : i32
    %c0_i32_0 = arith.constant 0 : i32
    return %arg0, %c0_i32 : i32, i32
  }
}

</mosaic_0001>

<llo_original>
// kernel: tpu_custom_call.1
$region0: #{tpu_custom_call.1}
  #allocation0 [shape = 'u32[]', space=smem, size = 0x4, offset = 0x4, fixed_abs, tag = 'smem constant byte address 0x4 - core index']
  #allocation1 [shape = 'u32[144,128]{1,0:T(1,128)}', space=vmem, size = 0x12000, scoped, tag = 'internal scratch']
  %s0 = inlined_call_operand.hbm [shape: bf16[8,256], index: 0, kind: input, shape index: {}]
  %s1 = inlined_call_operand.hbm [shape: bf16[8,256], index: 1, kind: input, shape index: {}]
  %s2 = inlined_call_operand.hbm [shape: bf16[256,128], index: 2, kind: input, shape index: {}]
  %s3 = inlined_call_operand.hbm [shape: bf16[256,128], index: 3, kind: input, shape index: {}]
  %s4 = inlined_call_operand.vmem [shape: f32[1,128], index: 4, kind: input, shape index: {}]
  %s5 = inlined_call_operand.hbm [shape: bf16[128,256], index: 5, kind: input, shape index: {}]
  %s6 = inlined_call_operand.vmem [shape: f32[1,256], index: 6, kind: input, shape index: {}]
  %s7 = inlined_call_operand.hbm [shape: bf16[256,256], index: 7, kind: input, shape index: {}]
  %s8 = inlined_call_operand.vmem [shape: f32[1,256], index: 8, kind: input, shape index: {}]
  %s9 = inlined_call_operand.hbm [shape: f32[8,256], index: 9, kind: output, shape index: {}]
  %s10 = sld [smem:[#allocation0]]
  $region70: #{tpu_custom_call.1} parent=0
    _
  %s12 = ssub.s32 1, %s10
  %s13 = scalar_select 0, %s12, %s10
  $region1: #{tpu_custom_call.1} parent=0
    #allocation2 [shape = 'u8[4096]{0}', space=vmem, size = 0x1000, scoped, tag = 'input window, operand 0, single buffered']
    #allocation3 [shape = 's32[1]{0}', space=sflag, size = 0x4, scoped, tag = 'scoped memory for tpu_custom_call.1']
    #allocation4 [shape = 's32[1]{0}', space=sflag, size = 0x4, scoped, tag = 'scoped memory for tpu_custom_call.1']
    #allocation5 [shape = 'u8[4096]{0}', space=vmem, size = 0x1000, scoped, tag = 'input window, operand 1, single buffered']
    #allocation6 [shape = 's32[1]{0}', space=sflag, size = 0x4, scoped, tag = 'scoped memory for tpu_custom_call.1']
    #allocation7 [shape = 'u8[65536]{0}', space=vmem, size = 0x10000, scoped, tag = 'input window, operand 2, single buffered']
    #allocation8 [shape = 'u8[65536]{0}', space=vmem, size = 0x10000, scoped, tag = 'input window, operand 3, single buffered']
    #allocation9 [shape = 's32[1]{0}', space=sflag, size = 0x4, scoped, tag = 'scoped memory for tpu_custom_call.1']
    #allocation10 [shape = 'u8[65536]{0}', space=vmem, size = 0x10000, scoped, tag = 'input window, operand 5, single buffered']
    #allocation11 [shape = 'u8[131072]{0}', space=vmem, size = 0x20000, scoped, tag = 'input window, operand 7, single buffered']
    #allocation12 [shape = 's32[1]{0}', space=sflag, size = 0x4, scoped, tag = 'scoped memory for tpu_custom_call.1']
    #allocation13 [shape = 'u8[8192]{0}', space=vmem, size = 0x2000, scoped, tag = 'output window, operand 0, single buffered']
    %14 = vsyncpa [#allocation3], 0
    %15 = vsyncpa [#allocation6], 0
    %16 = vsyncpa [#allocation9], 0
    %17 = vsyncpa [#allocation12], 0
    %18 = vsyncpa [#allocation4], 0
    // Predicated region
    $region2: #{tpu_custom_call.1} parent=1 // pred_check
      _
    $region3: #{tpu_custom_call.1} parent=1 // pred_check_branch
      %20 = sbr.rel (0) target = $region5
    $region4: #{tpu_custom_call.1} parent=1 // pred_region
      %s22 = ssub.s32 128, 128
      %23 = vsyncadd [#allocation3], %s22
      %s25 = sshll.u32 [#allocation2], 4
      %s26 = int_to_ptr.vmem [resolvable:$true] %s25
      %28 = dma.hbm_to_vmem [thread:$0]  %s0, 128, %s26, [#allocation3]
    $region5: #{tpu_custom_call.1} parent=1 // pred_fallthru
      _
    // Predicated region
    $region6: #{tpu_custom_call.1} parent=1 // pred_check
      _
    $region7: #{tpu_custom_call.1} parent=1 // pred_check_branch
      %30 = sbr.rel (0) target = $region9
    $region8: #{tpu_custom_call.1} parent=1 // pred_region
      %s32 = ssub.s32 128, 128
      %33 = vsyncadd [#allocation6], %s32
      %s35 = sshll.u32 [#allocation5], 4
      %s36 = int_to_ptr.vmem [resolvable:$true] %s35
      %38 = dma.hbm_to_vmem [thread:$0]  %s1, 128, %s36, [#allocation6]
    $region9: #{tpu_custom_call.1} parent=1 // pred_fallthru
      _
    // Predicated region
    $region10: #{tpu_custom_call.1} parent=1 // pred_check
      _
    $region11: #{tpu_custom_call.1} parent=1 // pred_check_branch
      %40 = sbr.rel (0) target = $region13
    $region12: #{tpu_custom_call.1} parent=1 // pred_region
      %s42 = ssub.s32 2048, 2048
      %43 = vsyncadd [#allocation6], %s42
      %s44 = sshll.u32 [#allocation7], 4
      %s45 = int_to_ptr.vmem [resolvable:$true] %s44
      %50 = dma.hbm_to_vmem [thread:$0]  %s2, 2048, %s45, [#allocation6], 64, 64, 4
    $region13: #{tpu_custom_call.1} parent=1 // pred_fallthru
      _
    // Predicated region
    $region14: #{tpu_custom_call.1} parent=1 // pred_check
      _
    $region15: #{tpu_custom_call.1} parent=1 // pred_check_branch
      %52 = sbr.rel (0) target = $region17
    $region16: #{tpu_custom_call.1} parent=1 // pred_region
      %s54 = ssub.s32 2048, 2048
      %55 = vsyncadd [#allocation9], %s54
      %s56 = sshll.u32 [#allocation8], 4
      %s57 = int_to_ptr.vmem [resolvable:$true] %s56
      %62 = dma.hbm_to_vmem [thread:$0]  %s3, 2048, %s57, [#allocation9], 64, 64, 4
    $region17: #{tpu_custom_call.1} parent=1 // pred_fallthru
      _
    // Predicated region
    $region18: #{tpu_custom_call.1} parent=1 // pred_check
      _
    $region19: #{tpu_custom_call.1} parent=1 // pred_check_branch
      %64 = sbr.rel (0) target = $region21
    $region20: #{tpu_custom_call.1} parent=1 // pred_region
      _
    $region21: #{tpu_custom_call.1} parent=1 // pred_fallthru
      _
    // Predicated region
    $region22: #{tpu_custom_call.1} parent=1 // pred_check
      _
    $region23: #{tpu_custom_call.1} parent=1 // pred_check_branch
      %66 = sbr.rel (0) target = $region25
    $region24: #{tpu_custom_call.1} parent=1 // pred_region
      %s68 = ssub.s32 2048, 2048
      %69 = vsyncadd [#allocation9], %s68
      %s70 = sshll.u32 [#allocation10], 4
      %s71 = int_to_ptr.vmem [resolvable:$true] %s70
      %76 = dma.hbm_to_vmem [thread:$0]  %s5, 2048, %s71, [#allocation9], 128, 128, 8
    $region25: #{tpu_custom_call.1} parent=1 // pred_fallthru
      _
    // Predicated region
    $region26: #{tpu_custom_call.1} parent=1 // pred_check
      _
    $region27: #{tpu_custom_call.1} parent=1 // pred_check_branch
      %78 = sbr.rel (0) target = $region29
    $region28: #{tpu_custom_call.1} parent=1 // pred_region
      _
    $region29: #{tpu_custom_call.1} parent=1 // pred_fallthru
      _
    // Predicated region
    $region30: #{tpu_custom_call.1} parent=1 // pred_check
      _
    $region31: #{tpu_custom_call.1} parent=1 // pred_check_branch
      %80 = sbr.rel (0) target = $region33
    $region32: #{tpu_custom_call.1} parent=1 // pred_region
      %s82 = ssub.s32 4096, 4096
      %83 = vsyncadd [#allocation12], %s82
      %s84 = sshll.u32 [#allocation11], 4
      %s85 = int_to_ptr.vmem [resolvable:$true] %s84
      %90 = dma.hbm_to_vmem [thread:$0]  %s7, 4096, %s85, [#allocation12], 128, 128, 8
    $region33: #{tpu_custom_call.1} parent=1 // pred_fallthru
      _
    // Predicated region
    $region34: #{tpu_custom_call.1} parent=1 // pred_check
      _
    $region35: #{tpu_custom_call.1} parent=1 // pred_check_branch
      %92 = sbr.rel (0) target = $region37
    $region36: #{tpu_custom_call.1} parent=1 // pred_region
      _
    $region37: #{tpu_custom_call.1} parent=1 // pred_fallthru
      _
    // Predicated region
    $region38: #{tpu_custom_call.1} parent=1 // pred_check
      _
    $region39: #{tpu_custom_call.1} parent=1 // pred_check_branch
      %94 = sbr.rel (0) target = $region41
    $region40: #{tpu_custom_call.1} parent=1 // pred_region
      %95 = dma.done [#allocation3], 128
    $region41: #{tpu_custom_call.1} parent=1 // pred_fallthru
      _
    // Predicated region
    $region42: #{tpu_custom_call.1} parent=1 // pred_check
      _
    $region43: #{tpu_custom_call.1} parent=1 // pred_check_branch
      %97 = sbr.rel (0) target = $region45
    $region44: #{tpu_custom_call.1} parent=1 // pred_region
      %98 = dma.done [#allocation6], 128
    $region45: #{tpu_custom_call.1} parent=1 // pred_fallthru
      _
    // Predicated region
    $region46: #{tpu_custom_call.1} parent=1 // pred_check
      _
    $region47: #{tpu_custom_call.1} parent=1 // pred_check_branch
      %100 = sbr.rel (0) target = $region49
    $region48: #{tpu_custom_call.1} parent=1 // pred_region
      %101 = dma.done [#allocation6], 2048
    $region49: #{tpu_custom_call.1} parent=1 // pred_fallthru
      _
    // Predicated region
    $region50: #{tpu_custom_call.1} parent=1 // pred_check
      _
    $region51: #{tpu_custom_call.1} parent=1 // pred_check_branch
      %103 = sbr.rel (0) target = $region53
    $region52: #{tpu_custom_call.1} parent=1 // pred_region
      %104 = dma.done [#allocation9], 2048
    $region53: #{tpu_custom_call.1} parent=1 // pred_fallthru
      _
    // Predicated region
    $region54: #{tpu_custom_call.1} parent=1 // pred_check
      _
    $region55: #{tpu_custom_call.1} parent=1 // pred_check_branch
      %106 = sbr.rel (0) target = $region57
    $region56: #{tpu_custom_call.1} parent=1 // pred_region
      %107 = dma.done [#allocation9], 2048
    $region57: #{tpu_custom_call.1} parent=1 // pred_fallthru
      _
    // Predicated region
    $region58: #{tpu_custom_call.1} parent=1 // pred_check
      _
    $region59: #{tpu_custom_call.1} parent=1 // pred_check_branch
      %109 = sbr.rel (0) target = $region61
    $region60: #{tpu_custom_call.1} parent=1 // pred_region
      %110 = dma.done [#allocation12], 4096
    $region61: #{tpu_custom_call.1} parent=1 // pred_fallthru
      _
    %v112 = vld [vmem:[#allocation2] sm:$0xff]
    %v113 = vld [vmem:[#allocation7] sm:$0xf]
    %v114 = vld [vmem:[#allocation7 + $0x4] sm:$0xf]
    %v115 = vld [vmem:[#allocation7 + $0x8] sm:$0xf]
    %v116 = vld [vmem:[#allocation7 + $0xc] sm:$0xf]
    %v117 = vld [vmem:[#allocation7 + $0x10] sm:$0xf]
    %v118 = vld [vmem:[#allocation7 + $0x14] sm:$0xf]
    %v119 = vld [vmem:[#allocation7 + $0x18] sm:$0xf]
    %v120 = vld [vmem:[#allocation7 + $0x1c] sm:$0xf]
    %v121 = vld [vmem:[#allocation7 + $0x20] sm:$0xf]
    %v122 = vld [vmem:[#allocation7 + $0x24] sm:$0xf]
    %v123 = vld [vmem:[#allocation7 + $0x28] sm:$0xf]
    %v124 = vld [vmem:[#allocation7 + $0x2c] sm:$0xf]
    %v125 = vld [vmem:[#allocation7 + $0x30] sm:$0xf]
    %v126 = vld [vmem:[#allocation7 + $0x34] sm:$0xf]
    %v127 = vld [vmem:[#allocation7 + $0x38] sm:$0xf]
    %v128 = vld [vmem:[#allocation7 + $0x3c] sm:$0xf]
    %v129 = vld [vmem:[#allocation7 + $0x40] sm:$0xf]
    %v130 = vld [vmem:[#allocation7 + $0x44] sm:$0xf]
    %v131 = vld [vmem:[#allocation7 + $0x48] sm:$0xf]
    %v132 = vld [vmem:[#allocation7 + $0x4c] sm:$0xf]
    %v133 = vld [vmem:[#allocation7 + $0x50] sm:$0xf]
    %v134 = vld [vmem:[#allocation7 + $0x54] sm:$0xf]
    %v135 = vld [vmem:[#allocation7 + $0x58] sm:$0xf]
    %v136 = vld [vmem:[#allocation7 + $0x5c] sm:$0xf]
    %v137 = vld [vmem:[#allocation7 + $0x60] sm:$0xf]
    %v138 = vld [vmem:[#allocation7 + $0x64] sm:$0xf]
    %v139 = vld [vmem:[#allocation7 + $0x68] sm:$0xf]
    %v140 = vld [vmem:[#allocation7 + $0x6c] sm:$0xf]
    %v141 = vld [vmem:[#allocation7 + $0x70] sm:$0xf]
    %v142 = vld [vmem:[#allocation7 + $0x74] sm:$0xf]
    %v143 = vld [vmem:[#allocation7 + $0x78] sm:$0xf]
    %v144 = vld [vmem:[#allocation7 + $0x7c] sm:$0xf]
    %v145 = vld [vmem:[#allocation5] sm:$0xff]
    %v146 = vld [vmem:[#allocation8] sm:$0xf]
    %v147 = vld [vmem:[#allocation8 + $0x4] sm:$0xf]
    %v148 = vld [vmem:[#allocation8 + $0x8] sm:$0xf]
    %v149 = vld [vmem:[#allocation8 + $0xc] sm:$0xf]
    %v150 = vld [vmem:[#allocation8 + $0x10] sm:$0xf]
    %v151 = vld [vmem:[#allocation8 + $0x14] sm:$0xf]
    %v152 = vld [vmem:[#allocation8 + $0x18] sm:$0xf]
    %v153 = vld [vmem:[#allocation8 + $0x1c] sm:$0xf]
    %v154 = vld [vmem:[#allocation8 + $0x20] sm:$0xf]
    %v155 = vld [vmem:[#allocation8 + $0x24] sm:$0xf]
    %v156 = vld [vmem:[#allocation8 + $0x28] sm:$0xf]
    %v157 = vld [vmem:[#allocation8 + $0x2c] sm:$0xf]
    %v158 = vld [vmem:[#allocation8 + $0x30] sm:$0xf]
    %v159 = vld [vmem:[#allocation8 + $0x34] sm:$0xf]
    %v160 = vld [vmem:[#allocation8 + $0x38] sm:$0xf]
    %v161 = vld [vmem:[#allocation8 + $0x3c] sm:$0xf]
    %v162 = vld [vmem:[#allocation8 + $0x40] sm:$0xf]
    %v163 = vld [vmem:[#allocation8 + $0x44] sm:$0xf]
    %v164 = vld [vmem:[#allocation8 + $0x48] sm:$0xf]
    %v165 = vld [vmem:[#allocation8 + $0x4c] sm:$0xf]
    %v166 = vld [vmem:[#allocation8 + $0x50] sm:$0xf]
    %v167 = vld [vmem:[#allocation8 + $0x54] sm:$0xf]
    %v168 = vld [vmem:[#allocation8 + $0x58] sm:$0xf]
    %v169 = vld [vmem:[#allocation8 + $0x5c] sm:$0xf]
    %v170 = vld [vmem:[#allocation8 + $0x60] sm:$0xf]
    %v171 = vld [vmem:[#allocation8 + $0x64] sm:$0xf]
    %v172 = vld [vmem:[#allocation8 + $0x68] sm:$0xf]
    %v173 = vld [vmem:[#allocation8 + $0x6c] sm:$0xf]
    %v174 = vld [vmem:[#allocation8 + $0x70] sm:$0xf]
    %v175 = vld [vmem:[#allocation8 + $0x74] sm:$0xf]
    %v176 = vld [vmem:[#allocation8 + $0x78] sm:$0xf]
    %v177 = vld [vmem:[#allocation8 + $0x7c] sm:$0xf]
    %v179 = vunpack.c.l.b16 %v145
    %v180 = vunpack.c.h.b16 %v145
    %v181 = vpack.c.b16 %v179, %v179
    %v182 = vpack.c.b16 %v180, %v180
    %v217 = vunpack.c.l.b16 %v146
    %v218 = vunpack.c.l.b16 %v147
    %v219 = vunpack.c.l.b16 %v148
    %v220 = vunpack.c.l.b16 %v149
    %v221 = vunpack.c.l.b16 %v150
    %v222 = vunpack.c.l.b16 %v151
    %v223 = vunpack.c.l.b16 %v152
    %v224 = vunpack.c.l.b16 %v153
    %v225 = vunpack.c.l.b16 %v154
    %v226 = vunpack.c.l.b16 %v155
    %v227 = vunpack.c.l.b16 %v156
    %v228 = vunpack.c.l.b16 %v157
    %v229 = vunpack.c.l.b16 %v158
    %v230 = vunpack.c.l.b16 %v159
    %v231 = vunpack.c.l.b16 %v160
    %v232 = vunpack.c.l.b16 %v161
    %v233 = vunpack.c.l.b16 %v162
    %v234 = vunpack.c.l.b16 %v163
    %v235 = vunpack.c.l.b16 %v164
    %v236 = vunpack.c.l.b16 %v165
    %v237 = vunpack.c.l.b16 %v166
    %v238 = vunpack.c.l.b16 %v167
    %v239 = vunpack.c.l.b16 %v168
    %v240 = vunpack.c.l.b16 %v169
    %v241 = vunpack.c.l.b16 %v170
    %v242 = vunpack.c.l.b16 %v171
    %v243 = vunpack.c.l.b16 %v172
    %v244 = vunpack.c.l.b16 %v173
    %v245 = vunpack.c.l.b16 %v174
    %v246 = vunpack.c.l.b16 %v175
    %v247 = vunpack.c.l.b16 %v176
    %v248 = vunpack.c.l.b16 %v177
    %v249 = vpack.c.b16 %v218, %v217
    %v250 = vpack.c.b16 %v220, %v219
    %v251 = vpack.c.b16 %v222, %v221
    %v252 = vpack.c.b16 %v224, %v223
    %v253 = vpack.c.b16 %v226, %v225
    %v254 = vpack.c.b16 %v228, %v227
    %v255 = vpack.c.b16 %v230, %v229
    %v256 = vpack.c.b16 %v232, %v231
    %v257 = vpack.c.b16 %v234, %v233
    %v258 = vpack.c.b16 %v236, %v235
    %v259 = vpack.c.b16 %v238, %v237
    %v260 = vpack.c.b16 %v240, %v239
    %v261 = vpack.c.b16 %v242, %v241
    %v262 = vpack.c.b16 %v244, %v243
    %v263 = vpack.c.b16 %v246, %v245
    %v264 = vpack.c.b16 %v248, %v247
    %281 = vmatprep.subr.bf16.mxu0 0
    %282 = vmatpush1.bf16.msra.mxu0 %v249
    %283 = vmatprep.subr.bf16.mxu0 0
    %284 = vmatpush1.bf16.msra.mxu0 %v250
    %285 = vmatprep.subr.bf16.mxu0 0
    %286 = vmatpush1.bf16.msra.mxu0 %v251
    %287 = vmatprep.subr.bf16.mxu0 0
    %288 = vmatpush1.bf16.msra.mxu0 %v252
    %289 = vmatprep.subr.bf16.mxu0 0
    %290 = vmatpush1.bf16.msra.mxu0 %v253
    %291 = vmatprep.subr.bf16.mxu0 0
    %292 = vmatpush1.bf16.msra.mxu0 %v254
    %293 = vmatprep.subr.bf16.mxu0 0
    %294 = vmatpush1.bf16.msra.mxu0 %v255
    %295 = vmatprep.subr.bf16.mxu0 0
    %296 = vmatpush1.bf16.msra.mxu0 %v256
    %297 = vmatprep.subr.bf16.mxu0 0
    %298 = vmatpush1.bf16.msra.mxu0 %v257
    %299 = vmatprep.subr.bf16.mxu0 0
    %300 = vmatpush1.bf16.msra.mxu0 %v258
    %301 = vmatprep.subr.bf16.mxu0 0
    %302 = vmatpush1.bf16.msra.mxu0 %v259
    %303 = vmatprep.subr.bf16.mxu0 0
    %304 = vmatpush1.bf16.msra.mxu0 %v260
    %305 = vmatprep.subr.bf16.mxu0 0
    %306 = vmatpush1.bf16.msra.mxu0 %v261
    %307 = vmatprep.subr.bf16.mxu0 0
    %308 = vmatpush1.bf16.msra.mxu0 %v262
    %309 = vmatprep.subr.bf16.mxu0 0
    %310 = vmatpush1.bf16.msra.mxu0 %v263
    %311 = vmatprep.subr.bf16.mxu0 0
    %312 = vmatpush1.bf16.msra.mxu0 %v264
    %313 = vmatprep.mubr.bf16.mxu0 %v182
    %314 = vmatmul.mubr.bf16.gmra.mrb[0].mxu0 %v181
    %v315 = vpop.f32.mrb[0].mxu0
    %v316 = vadd.f32 0.0, %v315
    %v317 = vpop.f32.mrb[0].mxu0
    %v318 = vpop.f32.mrb[0].mxu0
    %v319 = vpop.f32.mrb[0].mxu0
    %320 = vdwg.mxu0
    %v322 = vunpack.c.l.b16 %v112
    %v323 = vunpack.c.h.b16 %v112
    %v324 = vpack.c.b16 %v322, %v322
    %v325 = vpack.c.b16 %v323, %v323
    %v360 = vunpack.c.l.b16 %v113
    %v361 = vunpack.c.l.b16 %v114
    %v362 = vunpack.c.l.b16 %v115
    %v363 = vunpack.c.l.b16 %v116
    %v364 = vunpack.c.l.b16 %v117
    %v365 = vunpack.c.l.b16 %v118
    %v366 = vunpack.c.l.b16 %v119
    %v367 = vunpack.c.l.b16 %v120
    %v368 = vunpack.c.l.b16 %v121
    %v369 = vunpack.c.l.b16 %v122
    %v370 = vunpack.c.l.b16 %v123
    %v371 = vunpack.c.l.b16 %v124
    %v372 = vunpack.c.l.b16 %v125
    %v373 = vunpack.c.l.b16 %v126
    %v374 = vunpack.c.l.b16 %v127
    %v375 = vunpack.c.l.b16 %v128
    %v376 = vunpack.c.l.b16 %v129
    %v377 = vunpack.c.l.b16 %v130
    %v378 = vunpack.c.l.b16 %v131
    %v379 = vunpack.c.l.b16 %v132
    %v380 = vunpack.c.l.b16 %v133
    %v381 = vunpack.c.l.b16 %v134
    %v382 = vunpack.c.l.b16 %v135
    %v383 = vunpack.c.l.b16 %v136
    %v384 = vunpack.c.l.b16 %v137
    %v385 = vunpack.c.l.b16 %v138
    %v386 = vunpack.c.l.b16 %v139
    %v387 = vunpack.c.l.b16 %v140
    %v388 = vunpack.c.l.b16 %v141
    %v389 = vunpack.c.l.b16 %v142
    %v390 = vunpack.c.l.b16 %v143
    %v391 = vunpack.c.l.b16 %v144
    %v392 = vpack.c.b16 %v361, %v360
    %v393 = vpack.c.b16 %v363, %v362
    %v394 = vpack.c.b16 %v365, %v364
    %v395 = vpack.c.b16 %v367, %v366
    %v396 = vpack.c.b16 %v369, %v368
    %v397 = vpack.c.b16 %v371, %v370
    %v398 = vpack.c.b16 %v373, %v372
    %v399 = vpack.c.b16 %v375, %v374
    %v400 = vpack.c.b16 %v377, %v376
    %v401 = vpack.c.b16 %v379, %v378
    %v402 = vpack.c.b16 %v381, %v380
    %v403 = vpack.c.b16 %v383, %v382
    %v404 = vpack.c.b16 %v385, %v384
    %v405 = vpack.c.b16 %v387, %v386
    %v406 = vpack.c.b16 %v389, %v388
    %v407 = vpack.c.b16 %v391, %v390
    %424 = vmatprep.subr.bf16.mxu0 0
    %425 = vmatpush1.bf16.msra.mxu0 %v392
    %426 = vmatprep.subr.bf16.mxu0 0
    %427 = vmatpush1.bf16.msra.mxu0 %v393
    %428 = vmatprep.subr.bf16.mxu0 0
    %429 = vmatpush1.bf16.msra.mxu0 %v394
    %430 = vmatprep.subr.bf16.mxu0 0
    %431 = vmatpush1.bf16.msra.mxu0 %v395
    %432 = vmatprep.subr.bf16.mxu0 0
    %433 = vmatpush1.bf16.msra.mxu0 %v396
    %434 = vmatprep.subr.bf16.mxu0 0
    %435 = vmatpush1.bf16.msra.mxu0 %v397
    %436 = vmatprep.subr.bf16.mxu0 0
    %437 = vmatpush1.bf16.msra.mxu0 %v398
    %438 = vmatprep.subr.bf16.mxu0 0
    %439 = vmatpush1.bf16.msra.mxu0 %v399
    %440 = vmatprep.subr.bf16.mxu0 0
    %441 = vmatpush1.bf16.msra.mxu0 %v400
    %442 = vmatprep.subr.bf16.mxu0 0
    %443 = vmatpush1.bf16.msra.mxu0 %v401
    %444 = vmatprep.subr.bf16.mxu0 0
    %445 = vmatpush1.bf16.msra.mxu0 %v402
    %446 = vmatprep.subr.bf16.mxu0 0
    %447 = vmatpush1.bf16.msra.mxu0 %v403
    %448 = vmatprep.subr.bf16.mxu0 0
    %449 = vmatpush1.bf16.msra.mxu0 %v404
    %450 = vmatprep.subr.bf16.mxu0 0
    %451 = vmatpush1.bf16.msra.mxu0 %v405
    %452 = vmatprep.subr.bf16.mxu0 0
    %453 = vmatpush1.bf16.msra.mxu0 %v406
    %454 = vmatprep.subr.bf16.mxu0 0
    %455 = vmatpush1.bf16.msra.mxu0 %v407
    %456 = vmatprep.mubr.bf16.mxu0 %v325
    %457 = vmatmul.mubr.bf16.gmra.mrb[0].mxu0 %v324
    %v458 = vpop.f32.mrb[0].mxu0
    %v459 = vadd.f32 %v316, %v458
    %v460 = vpop.f32.mrb[0].mxu0
    %v461 = vpop.f32.mrb[0].mxu0
    %v462 = vpop.f32.mrb[0].mxu0
    %463 = vdwg.mxu0
    %v464 = vld [vmem:[%s4] sm:$0x1]
    %v466 = vlaneseq
    %v467 = vshrl.u32 %v466, 7
    %v468 = vsub.s32 0, %v467
    %v469 = vrot.slane %v464, %v468
    %v471 = vadd.f32 %v459, %v469
    %vm472 = vcmp.gt.f32.partialorder %v471, 0.0
    %v473 = vmin.f32 %v471, 0.0
    %v474 = vmul.f32 %v473, 1.442695
    %v475 = vpow.pop %v474
    %v476 = vsub.f32 %v475, 1.0
    %v477 = vmul.f32 %v476, 1.6732632
    %v478 = vsel %vm472, %v471, %v477
    %v479 = vmul.f32 %v478, 1.050701
    %v480 = vpack.c.bf16 %v479, %v479
    %v481 = vld [vmem:[#allocation10] sm:$0xff]
    %v482 = vld [vmem:[#allocation10 + $0x8] sm:$0xff]
    %v483 = vld [vmem:[#allocation10 + $0x10] sm:$0xff]
    %v484 = vld [vmem:[#allocation10 + $0x18] sm:$0xff]
    %v485 = vld [vmem:[#allocation10 + $0x20] sm:$0xff]
    %v486 = vld [vmem:[#allocation10 + $0x28] sm:$0xff]
    %v487 = vld [vmem:[#allocation10 + $0x30] sm:$0xff]
    %v488 = vld [vmem:[#allocation10 + $0x38] sm:$0xff]
    %v489 = vld [vmem:[#allocation10 + $0x40] sm:$0xff]
    %v490 = vld [vmem:[#allocation10 + $0x48] sm:$0xff]
    %v491 = vld [vmem:[#allocation10 + $0x50] sm:$0xff]
    %v492 = vld [vmem:[#allocation10 + $0x58] sm:$0xff]
    %v493 = vld [vmem:[#allocation10 + $0x60] sm:$0xff]
    %v494 = vld [vmem:[#allocation10 + $0x68] sm:$0xff]
    %v495 = vld [vmem:[#allocation10 + $0x70] sm:$0xff]
    %v496 = vld [vmem:[#allocation10 + $0x78] sm:$0xff]
    %v497 = vld [vmem:[%s6] sm:$0x3]
    %v499 = vlaneseq
    %v500 = vshrl.u32 %v499, 7
    %v501 = vsub.s32 0, %v500
    %v502 = vrot.slane %v497, %v501
    %v503 = vlaneseq
    %v504 = vshrl.u32 %v503, 7
    %v505 = vsub.s32 1, %v504
    %v506 = vrot.slane %v497, %v505
    %v525 = vunpack.c.l.b16 %v481
    %v526 = vunpack.c.h.b16 %v481
    %v527 = vunpack.c.l.b16 %v482
    %v528 = vunpack.c.h.b16 %v482
    %v529 = vunpack.c.l.b16 %v483
    %v530 = vunpack.c.h.b16 %v483
    %v531 = vunpack.c.l.b16 %v484
    %v532 = vunpack.c.h.b16 %v484
    %v533 = vunpack.c.l.b16 %v485
    %v534 = vunpack.c.h.b16 %v485
    %v535 = vunpack.c.l.b16 %v486
    %v536 = vunpack.c.h.b16 %v486
    %v537 = vunpack.c.l.b16 %v487
    %v538 = vunpack.c.h.b16 %v487
    %v539 = vunpack.c.l.b16 %v488
    %v540 = vunpack.c.h.b16 %v488
    %v541 = vunpack.c.l.b16 %v489
    %v542 = vunpack.c.h.b16 %v489
    %v543 = vunpack.c.l.b16 %v490
    %v544 = vunpack.c.h.b16 %v490
    %v545 = vunpack.c.l.b16 %v491
    %v546 = vunpack.c.h.b16 %v491
    %v547 = vunpack.c.l.b16 %v492
    %v548 = vunpack.c.h.b16 %v492
    %v549 = vunpack.c.l.b16 %v493
    %v550 = vunpack.c.h.b16 %v493
    %v551 = vunpack.c.l.b16 %v494
    %v552 = vunpack.c.h.b16 %v494
    %v553 = vunpack.c.l.b16 %v495
    %v554 = vunpack.c.h.b16 %v495
    %v555 = vunpack.c.l.b16 %v496
    %v556 = vunpack.c.h.b16 %v496
    %v557 = vpack.c.b16 %v527, %v525
    %v558 = vpack.c.b16 %v528, %v526
    %v559 = vpack.c.b16 %v531, %v529
    %v560 = vpack.c.b16 %v532, %v530
    %v561 = vpack.c.b16 %v535, %v533
    %v562 = vpack.c.b16 %v536, %v534
    %v563 = vpack.c.b16 %v539, %v537
    %v564 = vpack.c.b16 %v540, %v538
    %v565 = vpack.c.b16 %v543, %v541
    %v566 = vpack.c.b16 %v544, %v542
    %v567 = vpack.c.b16 %v547, %v545
    %v568 = vpack.c.b16 %v548, %v546
    %v569 = vpack.c.b16 %v551, %v549
    %v570 = vpack.c.b16 %v552, %v550
    %v571 = vpack.c.b16 %v555, %v553
    %v572 = vpack.c.b16 %v556, %v554
    %589 = vmatprep.subr.bf16.mxu0 %v558
    %590 = vmatpush1.bf16.msra.mxu0 %v557
    %591 = vmatprep.subr.bf16.mxu0 %v560
    %592 = vmatpush1.bf16.msra.mxu0 %v559
    %593 = vmatprep.subr.bf16.mxu0 %v562
    %594 = vmatpush1.bf16.msra.mxu0 %v561
    %595 = vmatprep.subr.bf16.mxu0 %v564
    %596 = vmatpush1.bf16.msra.mxu0 %v563
    %597 = vmatprep.subr.bf16.mxu0 %v566
    %598 = vmatpush1.bf16.msra.mxu0 %v565
    %599 = vmatprep.subr.bf16.mxu0 %v568
    %600 = vmatpush1.bf16.msra.mxu0 %v567
    %601 = vmatprep.subr.bf16.mxu0 %v570
    %602 = vmatpush1.bf16.msra.mxu0 %v569
    %603 = vmatprep.subr.bf16.mxu0 %v572
    %604 = vmatpush1.bf16.msra.mxu0 %v571
    %605 = vmatprep.subr.bf16.mxu0 0
    %606 = vmatpush1.bf16.msra.mxu0 0
    %607 = vmatprep.subr.bf16.mxu0 0
    %608 = vmatpush1.bf16.msra.mxu0 0
    %609 = vmatprep.subr.bf16.mxu0 0
    %610 = vmatpush1.bf16.msra.mxu0 0
    %611 = vmatprep.subr.bf16.mxu0 0
    %612 = vmatpush1.bf16.msra.mxu0 0
    %613 = vmatprep.subr.bf16.mxu0 0
    %614 = vmatpush1.bf16.msra.mxu0 0
    %615 = vmatprep.subr.bf16.mxu0 0
    %616 = vmatpush1.bf16.msra.mxu0 0
    %617 = vmatprep.subr.bf16.mxu0 0
    %618 = vmatpush1.bf16.msra.mxu0 0
    %619 = vmatprep.subr.bf16.mxu0 0
    %620 = vmatpush1.bf16.msra.mxu0 0
    %621 = vmatprep.mubr.bf16.mxu0 0
    %622 = vmatmul.mubr.bf16.gmra.mrb[0].mxu0 %v480
    %v623 = vpop.f32.mrb[0].mxu0
    %v624 = vadd.f32 %v502, %v623
    %v625 = vpop.f32.mrb[0].mxu0
    %v626 = vadd.f32 %v506, %v625
    %v627 = vpop.f32.mrb[0].mxu0
    %v628 = vpop.f32.mrb[0].mxu0
    %629 = vdwg.mxu0
    %vm630 = vcmp.gt.f32.partialorder %v624, 0.0
    %vm631 = vcmp.gt.f32.partialorder %v626, 0.0
    %v632 = vmin.f32 %v624, 0.0
    %v633 = vmin.f32 %v626, 0.0
    %v634 = vmul.f32 %v632, 1.442695
    %v635 = vpow.pop %v634
    %v636 = vmul.f32 %v633, 1.442695
    %v637 = vpow.pop %v636
    %v638 = vsub.f32 %v635, 1.0
    %v639 = vsub.f32 %v637, 1.0
    %v640 = vmul.f32 %v638, 1.6732632
    %v641 = vmul.f32 %v639, 1.6732632
    %v642 = vsel %vm630, %v624, %v640
    %v643 = vsel %vm631, %v626, %v641
    %v644 = vmul.f32 %v642, 1.050701
    %v645 = vmul.f32 %v643, 1.050701
    %v646 = vunpack.c.l.bf16 %v145
    %v647 = vunpack.c.h.bf16 %v145
    %v648 = vmul.f32 %v646, 0.4
    %v649 = vmul.f32 %v647, 0.4
    %v650 = vadd.f32 %v644, %v648
    %v651 = vadd.f32 %v645, %v649
    %v652 = vpack.c.bf16 %v650, %v650
    %v653 = vpack.c.bf16 %v651, %v651
    %v654 = vld [vmem:[#allocation11] sm:$0xff]
    %v655 = vld [vmem:[#allocation11 + $0x8] sm:$0xff]
    %v656 = vld [vmem:[#allocation11 + $0x10] sm:$0xff]
    %v657 = vld [vmem:[#allocation11 + $0x18] sm:$0xff]
    %v658 = vld [vmem:[#allocation11 + $0x20] sm:$0xff]
    %v659 = vld [vmem:[#allocation11 + $0x28] sm:$0xff]
    %v660 = vld [vmem:[#allocation11 + $0x30] sm:$0xff]
    %v661 = vld [vmem:[#allocation11 + $0x38] sm:$0xff]
    %v662 = vld [vmem:[#allocation11 + $0x40] sm:$0xff]
    %v663 = vld [vmem:[#allocation11 + $0x48] sm:$0xff]
    %v664 = vld [vmem:[#allocation11 + $0x50] sm:$0xff]
    %v665 = vld [vmem:[#allocation11 + $0x58] sm:$0xff]
    %v666 = vld [vmem:[#allocation11 + $0x60] sm:$0xff]
    %v667 = vld [vmem:[#allocation11 + $0x68] sm:$0xff]
    %v668 = vld [vmem:[#allocation11 + $0x70] sm:$0xff]
    %v669 = vld [vmem:[#allocation11 + $0x78] sm:$0xff]
    %v670 = vld [vmem:[#allocation11 + $0x80] sm:$0xff]
    %v671 = vld [vmem:[#allocation11 + $0x88] sm:$0xff]
    %v672 = vld [vmem:[#allocation11 + $0x90] sm:$0xff]
    %v673 = vld [vmem:[#allocation11 + $0x98] sm:$0xff]
    %v674 = vld [vmem:[#allocation11 + $0xa0] sm:$0xff]
    %v675 = vld [vmem:[#allocation11 + $0xa8] sm:$0xff]
    %v676 = vld [vmem:[#allocation11 + $0xb0] sm:$0xff]
    %v677 = vld [vmem:[#allocation11 + $0xb8] sm:$0xff]
    %v678 = vld [vmem:[#allocation11 + $0xc0] sm:$0xff]
    %v679 = vld [vmem:[#allocation11 + $0xc8] sm:$0xff]
    %v680 = vld [vmem:[#allocation11 + $0xd0] sm:$0xff]
    %v681 = vld [vmem:[#allocation11 + $0xd8] sm:$0xff]
    %v682 = vld [vmem:[#allocation11 + $0xe0] sm:$0xff]
    %v683 = vld [vmem:[#allocation11 + $0xe8] sm:$0xff]
    %v684 = vld [vmem:[#allocation11 + $0xf0] sm:$0xff]
    %v685 = vld [vmem:[#allocation11 + $0xf8] sm:$0xff]
    %v686 = vld [vmem:[%s8] sm:$0x3]
    %v688 = vlaneseq
    %v689 = vshrl.u32 %v688, 7
    %v690 = vsub.s32 0, %v689
    %v691 = vrot.slane %v686, %v690
    %v692 = vlaneseq
    %v693 = vshrl.u32 %v692, 7
    %v694 = vsub.s32 1, %v693
    %v695 = vrot.slane %v686, %v694
    %v730 = vunpack.c.l.b16 %v654
    %v731 = vunpack.c.h.b16 %v654
    %v732 = vunpack.c.l.b16 %v655
    %v733 = vunpack.c.h.b16 %v655
    %v734 = vunpack.c.l.b16 %v656
    %v735 = vunpack.c.h.b16 %v656
    %v736 = vunpack.c.l.b16 %v657
    %v737 = vunpack.c.h.b16 %v657
    %v738 = vunpack.c.l.b16 %v658
    %v739 = vunpack.c.h.b16 %v658
    %v740 = vunpack.c.l.b16 %v659
    %v741 = vunpack.c.h.b16 %v659
    %v742 = vunpack.c.l.b16 %v660
    %v743 = vunpack.c.h.b16 %v660
    %v744 = vunpack.c.l.b16 %v661
    %v745 = vunpack.c.h.b16 %v661
    %v746 = vunpack.c.l.b16 %v662
    %v747 = vunpack.c.h.b16 %v662
    %v748 = vunpack.c.l.b16 %v663
    %v749 = vunpack.c.h.b16 %v663
    %v750 = vunpack.c.l.b16 %v664
    %v751 = vunpack.c.h.b16 %v664
    %v752 = vunpack.c.l.b16 %v665
    %v753 = vunpack.c.h.b16 %v665
    %v754 = vunpack.c.l.b16 %v666
    %v755 = vunpack.c.h.b16 %v666
    %v756 = vunpack.c.l.b16 %v667
    %v757 = vunpack.c.h.b16 %v667
    %v758 = vunpack.c.l.b16 %v668
    %v759 = vunpack.c.h.b16 %v668
    %v760 = vunpack.c.l.b16 %v669
    %v761 = vunpack.c.h.b16 %v669
    %v762 = vunpack.c.l.b16 %v670
    %v763 = vunpack.c.h.b16 %v670
    %v764 = vunpack.c.l.b16 %v671
    %v765 = vunpack.c.h.b16 %v671
    %v766 = vunpack.c.l.b16 %v672
    %v767 = vunpack.c.h.b16 %v672
    %v768 = vunpack.c.l.b16 %v673
    %v769 = vunpack.c.h.b16 %v673
    %v770 = vunpack.c.l.b16 %v674
    %v771 = vunpack.c.h.b16 %v674
    %v772 = vunpack.c.l.b16 %v675
    %v773 = vunpack.c.h.b16 %v675
    %v774 = vunpack.c.l.b16 %v676
    %v775 = vunpack.c.h.b16 %v676
    %v776 = vunpack.c.l.b16 %v677
    %v777 = vunpack.c.h.b16 %v677
    %v778 = vunpack.c.l.b16 %v678
    %v779 = vunpack.c.h.b16 %v678
    %v780 = vunpack.c.l.b16 %v679
    %v781 = vunpack.c.h.b16 %v679
    %v782 = vunpack.c.l.b16 %v680
    %v783 = vunpack.c.h.b16 %v680
    %v784 = vunpack.c.l.b16 %v681
    %v785 = vunpack.c.h.b16 %v681
    %v786 = vunpack.c.l.b16 %v682
    %v787 = vunpack.c.h.b16 %v682
    %v788 = vunpack.c.l.b16 %v683
    %v789 = vunpack.c.h.b16 %v683
    %v790 = vunpack.c.l.b16 %v684
    %v791 = vunpack.c.h.b16 %v684
    %v792 = vunpack.c.l.b16 %v685
    %v793 = vunpack.c.h.b16 %v685
    %v794 = vpack.c.b16 %v732, %v730
    %v795 = vpack.c.b16 %v733, %v731
    %v796 = vpack.c.b16 %v736, %v734
    %v797 = vpack.c.b16 %v737, %v735
    %v798 = vpack.c.b16 %v740, %v738
    %v799 = vpack.c.b16 %v741, %v739
    %v800 = vpack.c.b16 %v744, %v742
    %v801 = vpack.c.b16 %v745, %v743
    %v802 = vpack.c.b16 %v748, %v746
    %v803 = vpack.c.b16 %v749, %v747
    %v804 = vpack.c.b16 %v752, %v750
    %v805 = vpack.c.b16 %v753, %v751
    %v806 = vpack.c.b16 %v756, %v754
    %v807 = vpack.c.b16 %v757, %v755
    %v808 = vpack.c.b16 %v760, %v758
    %v809 = vpack.c.b16 %v761, %v759
    %v810 = vpack.c.b16 %v764, %v762
    %v811 = vpack.c.b16 %v765, %v763
    %v812 = vpack.c.b16 %v768, %v766
    %v813 = vpack.c.b16 %v769, %v767
    %v814 = vpack.c.b16 %v772, %v770
    %v815 = vpack.c.b16 %v773, %v771
    %v816 = vpack.c.b16 %v776, %v774
    %v817 = vpack.c.b16 %v777, %v775
    %v818 = vpack.c.b16 %v780, %v778
    %v819 = vpack.c.b16 %v781, %v779
    %v820 = vpack.c.b16 %v784, %v782
    %v821 = vpack.c.b16 %v785, %v783
    %v822 = vpack.c.b16 %v788, %v786
    %v823 = vpack.c.b16 %v789, %v787
    %v824 = vpack.c.b16 %v792, %v790
    %v825 = vpack.c.b16 %v793, %v791
    %858 = vmatprep.subr.bf16.mxu0 %v795
    %859 = vmatpush1.bf16.msra.mxu0 %v794
    %860 = vmatprep.subr.bf16.mxu0 %v797
    %861 = vmatpush1.bf16.msra.mxu0 %v796
    %862 = vmatprep.subr.bf16.mxu0 %v799
    %863 = vmatpush1.bf16.msra.mxu0 %v798
    %864 = vmatprep.subr.bf16.mxu0 %v801
    %865 = vmatpush1.bf16.msra.mxu0 %v800
    %866 = vmatprep.subr.bf16.mxu0 %v803
    %867 = vmatpush1.bf16.msra.mxu0 %v802
    %868 = vmatprep.subr.bf16.mxu0 %v805
    %869 = vmatpush1.bf16.msra.mxu0 %v804
    %870 = vmatprep.subr.bf16.mxu0 %v807
    %871 = vmatpush1.bf16.msra.mxu0 %v806
    %872 = vmatprep.subr.bf16.mxu0 %v809
    %873 = vmatpush1.bf16.msra.mxu0 %v808
    %874 = vmatprep.subr.bf16.mxu0 %v811
    %875 = vmatpush1.bf16.msra.mxu0 %v810
    %876 = vmatprep.subr.bf16.mxu0 %v813
    %877 = vmatpush1.bf16.msra.mxu0 %v812
    %878 = vmatprep.subr.bf16.mxu0 %v815
    %879 = vmatpush1.bf16.msra.mxu0 %v814
    %880 = vmatprep.subr.bf16.mxu0 %v817
    %881 = vmatpush1.bf16.msra.mxu0 %v816
    %882 = vmatprep.subr.bf16.mxu0 %v819
    %883 = vmatpush1.bf16.msra.mxu0 %v818
    %884 = vmatprep.subr.bf16.mxu0 %v821
    %885 = vmatpush1.bf16.msra.mxu0 %v820
    %886 = vmatprep.subr.bf16.mxu0 %v823
    %887 = vmatpush1.bf16.msra.mxu0 %v822
    %888 = vmatprep.subr.bf16.mxu0 %v825
    %889 = vmatpush1.bf16.msra.mxu0 %v824
    %890 = vmatprep.mubr.bf16.mxu0 %v653
    %891 = vmatmul.mubr.bf16.gmra.mrb[0].mxu0 %v652
    %v892 = vpop.f32.mrb[0].mxu0
    %v893 = vadd.f32 %v691, %v892
    %v894 = vpop.f32.mrb[0].mxu0
    %v895 = vadd.f32 %v695, %v894
    %v896 = vpop.f32.mrb[0].mxu0
    %v897 = vpop.f32.mrb[0].mxu0
    %898 = vdwg.mxu0
    %vm899 = vcmp.gt.f32.partialorder %v893, 0.0
    %vm900 = vcmp.gt.f32.partialorder %v895, 0.0
    %v901 = vmin.f32 %v893, 0.0
    %v902 = vmin.f32 %v895, 0.0
    %v903 = vmul.f32 %v901, 1.442695
    %v904 = vpow.pop %v903
    %v905 = vmul.f32 %v902, 1.442695
    %v906 = vpow.pop %v905
    %v907 = vsub.f32 %v904, 1.0
    %v908 = vsub.f32 %v906, 1.0
    %v909 = vmul.f32 %v907, 1.6732632
    %v910 = vmul.f32 %v908, 1.6732632
    %v911 = vsel %vm899, %v893, %v909
    %v912 = vsel %vm900, %v895, %v910
    %v913 = vmul.f32 %v911, 1.050701
    %v914 = vmul.f32 %v912, 1.050701
    %v915 = vunpack.c.l.bf16 %v112
    %v916 = vunpack.c.h.bf16 %v112
    %v917 = vadd.f32 %v913, %v915
    %v918 = vadd.f32 %v914, %v916
    %v919 = vsub.f32 %v917, 0.5
    %v920 = vsub.f32 %v918, 0.5
    %v921 = vmul.f32 %v919, 5.0
    %v922 = vmul.f32 %v920, 5.0
    %v923 = vmul.f32 %v921, 0.5
    %v924 = vmul.f32 %v922, 0.5
    %v925 = vtanh.pop %v923
    %v926 = vtanh.pop %v924
    %v927 = vmul.f32 %v925, 0.5
    %v928 = vmul.f32 %v926, 0.5
    %v929 = vadd.f32 %v927, 0.5
    %v930 = vadd.f32 %v928, 0.5
    %931 = vst [vmem:[#allocation13] sm:$0xff] %v929
    %932 = vst [vmem:[#allocation13 + $0x8] sm:$0xff] %v930
    // Predicated region
    $region62: #{tpu_custom_call.1} parent=1 // pred_check
      _
    $region63: #{tpu_custom_call.1} parent=1 // pred_check_branch
      %934 = sbr.rel (0) target = $region65
    $region64: #{tpu_custom_call.1} parent=1 // pred_region
      %s936 = ssub.s32 256, 256
      %937 = vsyncadd [#allocation4], %s936
      %s939 = sshll.u32 [#allocation13], 4
      %s940 = int_to_ptr.vmem [resolvable:$true] %s939
      %942 = dma.vmem_to_hbm [thread:$0]  %s940, 256, %s9, [#allocation4]
    $region65: #{tpu_custom_call.1} parent=1 // pred_fallthru
      _
    // Predicated region
    $region66: #{tpu_custom_call.1} parent=1 // pred_check
      _
    $region67: #{tpu_custom_call.1} parent=1 // pred_check_branch
      %944 = sbr.rel (0) target = $region69
    $region68: #{tpu_custom_call.1} parent=1 // pred_region
      %945 = dma.done [#allocation4], 256
    $region69: #{tpu_custom_call.1} parent=1 // pred_fallthru
      _
    %946 = vsyncpa [#allocation3], 1
    %947 = vsyncpa [#allocation6], 1
    %948 = vsyncpa [#allocation9], 1
    %949 = vsyncpa [#allocation12], 1
    %950 = vsyncpa [#allocation4], 1

</llo_original>
